<compile_context>
chip_gen: v6e
topology: v6e:2x2x1
jax: 0.10.0
libtpu: 0.0.40
codegen_flags: <defaults>
</compile_context>

<pallas_src>
import jax
import jax.numpy as jnp
from jax import lax
from jax.experimental import pallas as pl
from jax.experimental.pallas import tpu as pltpu


def dwconv_kernel(x_ref, w_ref, b_ref, o_ref):
    """Depthwise 3x3 conv (stride 1, zero pad 1) on one (batch-fold, C-tile) block.

    x_ref : (NB, H, W, TC) input tile (NHWC; channels on lanes, W on sublanes)
    w_ref : (3, 3, TC)     depthwise weights (ky, kx, channel)
    b_ref : (1, TC)        bias
    o_ref : (NB, H, W, TC) output tile
    """
    nb, H, W, TC = o_ref.shape

    x = x_ref[...].astype(jnp.float32)      # single upfront cast
    w = w_ref[...].astype(jnp.float32)      # (3, 3, TC), stays in vregs
    b = b_ref[...].astype(jnp.float32)      # (1, TC), broadcasts over lanes

    # W (sublane) shifts via XLU roll; zero the wrapped edge column.
    #   xl[.., wx, :] = X[.., wx-1, :]  (kx = -1 tap), column 0 is out of image
    #   xr[.., wx, :] = X[.., wx+1, :]  (kx = +1 tap), column W-1 is out of image
    col = lax.broadcasted_iota(jnp.int32, (W, TC), 0)
    xl = jnp.where(col == 0, 0.0, pltpu.roll(x, shift=1, axis=2))
    xr = jnp.where(col == W - 1, 0.0, pltpu.roll(x, shift=W - 1, axis=2))

    # Horizontal 3-tap partial sums for each kernel row ky = j - 1:
    #   r_j[y, wx] = X[y, wx-1]*w[j,0] + X[y, wx]*w[j,1] + X[y, wx+1]*w[j,2]
    r0 = xl * w[0, 0] + x * w[0, 1] + xr * w[0, 2]
    r1 = xl * w[1, 0] + x * w[1, 1] + xr * w[1, 2]
    r2 = xl * w[2, 0] + x * w[2, 1] + xr * w[2, 2]

    # Vertical combine: out[y] = r0[y-1] + r1[y] + r2[y+1] (zero outside the
    # image).  H is a major dim, so these shifts are cheap vreg-group copies
    # and the final store is one full-tile, lane-dense vst.
    if H > 1:
        zrow = jnp.zeros((nb, 1, W, TC), jnp.float32)
        r0_sh = jnp.concatenate([zrow, r0[:, :H - 1]], axis=1)
        r2_sh = jnp.concatenate([r2[:, 1:], zrow], axis=1)
    else:
        r0_sh = jnp.zeros_like(r1)
        r2_sh = jnp.zeros_like(r1)

    o_ref[...] = (r1 + r0_sh + r2_sh + b).astype(o_ref.dtype)


def _choose_tiles(N, H, W, C, itemsize):
    """Pick (batch-fold nb, channel tile tc).

    Targets ~1 MiB of input per grid step to amortize per-step overhead while
    keeping >= 2 grid steps when possible (v7x has 2 TensorCores) and keeping
    the per-step VMEM footprint modest (fits default scoped VMEM on v7x).
    """
    # Channel tile: lane-dense multiple of 128 that divides C; otherwise use
    # the full C as a single block (block last-dim == full array dim is legal,
    # avoids host-side padding of x and slicing of the output).
    tc = C
    for cand in (256, 128):
        if C % cand == 0:
            tc = cand
            break

    target = 1 << 20  # ~1 MiB of input per grid step
    per_batch = H * W * tc * itemsize
    nb = max(1, min(N, target // max(per_batch, 1)))
    while N % nb != 0:
        nb -= 1
    # Keep the grid shardable across 2 TensorCores when we can.
    if (N // nb) * (C // tc) < 2 and nb > 1:
        nb = nb // 2
        while N % nb != 0:
            nb -= 1
    return nb, tc


def dwconv(x, weight, bias):
    """Depthwise 3x3 conv, stride 1, pad 1, NHWC (== DWConv.forward).

    x: (N, H, W, C); weight: (3, 3, C) (torch Conv2d weight (C, 1, 3, 3)
    permuted to (ky, kx, c)); bias: (C,).  Returns (N, H, W, C).
    """
    N, H, W, C = x.shape
    nb, tc = _choose_tiles(N, H, W, C, x.dtype.itemsize)
    bias2d = bias.reshape(1, C)

    return pl.pallas_call(
        dwconv_kernel,
        out_shape=jax.ShapeDtypeStruct((N, H, W, C), x.dtype),
        grid_spec=pltpu.PrefetchScalarGridSpec(
            num_scalar_prefetch=0,
            grid=(N // nb, C // tc),
            in_specs=[
                pl.BlockSpec((nb, H, W, tc), lambda n, c: (n, 0, 0, c)),
                pl.BlockSpec((3, 3, tc), lambda n, c: (0, 0, c)),
                pl.BlockSpec((1, tc), lambda n, c: (0, c)),
            ],
            out_specs=pl.BlockSpec((nb, H, W, tc), lambda n, c: (n, 0, 0, c)),
        ),
        compiler_params=pltpu.CompilerParams(
            dimension_semantics=("parallel", "parallel"),
        ),
    )(x, weight, bias2d)


def dwconv_ref(x, weight, bias):
    """Pure-JAX reference (depthwise 3x3, stride 1, pad 1, NHWC)."""
    N, H, W, C = x.shape
    xp = jnp.pad(x.astype(jnp.float32), ((0, 0), (1, 1), (1, 1), (0, 0)))
    acc = jnp.zeros((N, H, W, C), jnp.float32)
    for dy in range(3):
        for dx in range(3):
            acc = acc + xp[:, dy:dy + H, dx:dx + W, :] * weight[dy, dx, :].astype(jnp.float32)
    return (acc + bias.astype(jnp.float32)).astype(x.dtype)


if __name__ == "__main__":
    key = jax.random.PRNGKey(0)
    kx_, kw_, kb_ = jax.random.split(key, 3)

    fan_in = 9.0          # (in_channels / groups) * k * k = 1 * 3 * 3
    bound = 1.0 / float(fan_in) ** 0.5

    # Lane-dense case: C a multiple of 128.
    N, H, W, C = 2, 16, 16, 128
    x = jax.random.normal(kx_, (N, H, W, C), dtype=jnp.float32)
    w = jax.random.uniform(kw_, (3, 3, C), jnp.float32, -bound, bound)
    b = jax.random.uniform(kb_, (C,), jnp.float32, -bound, bound)
    out = jax.block_until_ready(dwconv(x, w, b))
    ref = dwconv_ref(x, w, b)
    assert out.shape == (N, H, W, C)
    assert jnp.allclose(out, ref, atol=1e-5, rtol=1e-5)

    # Channel count not a multiple of 128 (exercises the full-C single-tile
    # path: no host-side padding of x, no output slicing).
    C2 = 96
    x2 = jax.random.normal(kx_, (N, H, W, C2), dtype=jnp.float32)
    w2 = jax.random.uniform(kw_, (3, 3, C2), jnp.float32, -bound, bound)
    b2 = jax.random.uniform(kb_, (C2,), jnp.float32, -bound, bound)
    out2 = jax.block_until_ready(dwconv(x2, w2, b2))
    ref2 = dwconv_ref(x2, w2, b2)
    assert out2.shape == (N, H, W, C2)
    assert jnp.allclose(out2, ref2, atol=1e-5, rtol=1e-5)

    print("KERNEL_OK")
</pallas_src>

<mosaic_0001>
module attributes {stable_mosaic.version = 11 : i64} {
  func.func @dwconv_kernel(%arg0: i32, %arg1: i32, %arg2: memref<1x16x16x128xf32, #tpu.memory_space<vmem>>, %arg3: memref<3x3x128xf32, #tpu.memory_space<vmem>>, %arg4: memref<1x128xf32, #tpu.memory_space<vmem>>, %arg5: memref<1x16x16x128xf32, #tpu.memory_space<vmem>>) attributes {dimension_semantics = [#tpu.dimension_semantics<parallel>, #tpu.dimension_semantics<parallel>], iteration_bounds = array<i64: 2, 1>, scalar_prefetch = 0 : i64, scratch_operands = 0 : i64, tpu.core_type = #tpu.core_type<tc>, window_params = [{transform_indices = @transform_0, window_bounds = array<i64: 1, 16, 16, 128>}, {transform_indices = @transform_1, window_bounds = array<i64: 3, 3, 128>}, {transform_indices = @transform_2, window_bounds = array<i64: 1, 128>}, {transform_indices = @transform_3, window_bounds = array<i64: 1, 16, 16, 128>}]} {
    %c0 = arith.constant 0 : index
    %c0_0 = arith.constant 0 : index
    %c0_1 = arith.constant 0 : index
    %c0_2 = arith.constant 0 : index
    %0 = vector.load %arg2[%c0, %c0_0, %c0_1, %c0_2] : memref<1x16x16x128xf32, #tpu.memory_space<vmem>>, vector<1x16x16x128xf32>
    %c0_3 = arith.constant 0 : index
    %c0_4 = arith.constant 0 : index
    %c0_5 = arith.constant 0 : index
    %1 = vector.load %arg3[%c0_3, %c0_4, %c0_5] : memref<3x3x128xf32, #tpu.memory_space<vmem>>, vector<3x3x128xf32>
    %c0_6 = arith.constant 0 : index
    %c0_7 = arith.constant 0 : index
    %2 = vector.load %arg4[%c0_6, %c0_7] : memref<1x128xf32, #tpu.memory_space<vmem>>, vector<1x128xf32>
    %3 = tpu.iota {dimensions = array<i32: 0>} : vector<16x128xi32>
    %c0_i32 = arith.constant 0 : i32
    %4 = vector.broadcast %c0_i32 : i32 to vector<16x128xi32>
    %5 = arith.cmpi eq, %3, %4 : vector<16x128xi32>
    %c1_i32 = arith.constant 1 : i32
    %6 = tpu.dynamic_rotate %0 by %c1_i32 dim 2 : vector<1x16x16x128xf32>, i32 -> vector<1x16x16x128xf32>
    %cst = arith.constant 0.000000e+00 : f32
    %7 = vector.shape_cast %5 : vector<16x128xi1> to vector<1x1x16x128xi1>
    %8 = vector.broadcast %7 : vector<1x1x16x128xi1> to vector<1x16x16x128xi1>
    %9 = vector.broadcast %cst : f32 to vector<1x16x16x128xf32>
    %10 = arith.select %8, %9, %6 : vector<1x16x16x128xi1>, vector<1x16x16x128xf32>
    %c15_i32 = arith.constant 15 : i32
    %11 = vector.broadcast %c15_i32 : i32 to vector<16x128xi32>
    %12 = arith.cmpi eq, %3, %11 : vector<16x128xi32>
    %c15_i32_8 = arith.constant 15 : i32
    %13 = tpu.dynamic_rotate %0 by %c15_i32_8 dim 2 : vector<1x16x16x128xf32>, i32 -> vector<1x16x16x128xf32>
    %cst_9 = arith.constant 0.000000e+00 : f32
    %14 = vector.shape_cast %12 : vector<16x128xi1> to vector<1x1x16x128xi1>
    %15 = vector.broadcast %14 : vector<1x1x16x128xi1> to vector<1x16x16x128xi1>
    %16 = vector.broadcast %cst_9 : f32 to vector<1x16x16x128xf32>
    %17 = arith.select %15, %16, %13 : vector<1x16x16x128xi1>, vector<1x16x16x128xf32>
    %18 = vector.extract_strided_slice %1 {offsets = [0, 0, 0], sizes = [1, 1, 128], strides = [1, 1, 1]} : vector<3x3x128xf32> to vector<1x1x128xf32>
    %19 = vector.shape_cast %18 : vector<1x1x128xf32> to vector<128xf32>
    %20 = vector.shape_cast %19 : vector<128xf32> to vector<1x1x1x128xf32>
    %21 = vector.broadcast %20 : vector<1x1x1x128xf32> to vector<1x16x16x128xf32>
    %22 = arith.mulf %10, %21 : vector<1x16x16x128xf32>
    %23 = vector.extract_strided_slice %1 {offsets = [0, 1, 0], sizes = [1, 1, 128], strides = [1, 1, 1]} : vector<3x3x128xf32> to vector<1x1x128xf32>
    %24 = vector.shape_cast %23 : vector<1x1x128xf32> to vector<128xf32>
    %25 = vector.shape_cast %24 : vector<128xf32> to vector<1x1x1x128xf32>
    %26 = vector.broadcast %25 : vector<1x1x1x128xf32> to vector<1x16x16x128xf32>
    %27 = arith.mulf %0, %26 : vector<1x16x16x128xf32>
    %28 = arith.addf %22, %27 : vector<1x16x16x128xf32>
    %29 = vector.extract_strided_slice %1 {offsets = [0, 2, 0], sizes = [1, 1, 128], strides = [1, 1, 1]} : vector<3x3x128xf32> to vector<1x1x128xf32>
    %30 = vector.shape_cast %29 : vector<1x1x128xf32> to vector<128xf32>
    %31 = vector.shape_cast %30 : vector<128xf32> to vector<1x1x1x128xf32>
    %32 = vector.broadcast %31 : vector<1x1x1x128xf32> to vector<1x16x16x128xf32>
    %33 = arith.mulf %17, %32 : vector<1x16x16x128xf32>
    %34 = arith.addf %28, %33 : vector<1x16x16x128xf32>
    %35 = vector.extract_strided_slice %1 {offsets = [1, 0, 0], sizes = [1, 1, 128], strides = [1, 1, 1]} : vector<3x3x128xf32> to vector<1x1x128xf32>
    %36 = vector.shape_cast %35 : vector<1x1x128xf32> to vector<128xf32>
    %37 = vector.shape_cast %36 : vector<128xf32> to vector<1x1x1x128xf32>
    %38 = vector.broadcast %37 : vector<1x1x1x128xf32> to vector<1x16x16x128xf32>
    %39 = arith.mulf %10, %38 : vector<1x16x16x128xf32>
    %40 = vector.extract_strided_slice %1 {offsets = [1, 1, 0], sizes = [1, 1, 128], strides = [1, 1, 1]} : vector<3x3x128xf32> to vector<1x1x128xf32>
    %41 = vector.shape_cast %40 : vector<1x1x128xf32> to vector<128xf32>
    %42 = vector.shape_cast %41 : vector<128xf32> to vector<1x1x1x128xf32>
    %43 = vector.broadcast %42 : vector<1x1x1x128xf32> to vector<1x16x16x128xf32>
    %44 = arith.mulf %0, %43 : vector<1x16x16x128xf32>
    %45 = arith.addf %39, %44 : vector<1x16x16x128xf32>
    %46 = vector.extract_strided_slice %1 {offsets = [1, 2, 0], sizes = [1, 1, 128], strides = [1, 1, 1]} : vector<3x3x128xf32> to vector<1x1x128xf32>
    %47 = vector.shape_cast %46 : vector<1x1x128xf32> to vector<128xf32>
    %48 = vector.shape_cast %47 : vector<128xf32> to vector<1x1x1x128xf32>
    %49 = vector.broadcast %48 : vector<1x1x1x128xf32> to vector<1x16x16x128xf32>
    %50 = arith.mulf %17, %49 : vector<1x16x16x128xf32>
    %51 = arith.addf %45, %50 : vector<1x16x16x128xf32>
    %52 = vector.extract_strided_slice %1 {offsets = [2, 0, 0], sizes = [1, 1, 128], strides = [1, 1, 1]} : vector<3x3x128xf32> to vector<1x1x128xf32>
    %53 = vector.shape_cast %52 : vector<1x1x128xf32> to vector<128xf32>
    %54 = vector.shape_cast %53 : vector<128xf32> to vector<1x1x1x128xf32>
    %55 = vector.broadcast %54 : vector<1x1x1x128xf32> to vector<1x16x16x128xf32>
    %56 = arith.mulf %10, %55 : vector<1x16x16x128xf32>
    %57 = vector.extract_strided_slice %1 {offsets = [2, 1, 0], sizes = [1, 1, 128], strides = [1, 1, 1]} : vector<3x3x128xf32> to vector<1x1x128xf32>
    %58 = vector.shape_cast %57 : vector<1x1x128xf32> to vector<128xf32>
    %59 = vector.shape_cast %58 : vector<128xf32> to vector<1x1x1x128xf32>
    %60 = vector.broadcast %59 : vector<1x1x1x128xf32> to vector<1x16x16x128xf32>
    %61 = arith.mulf %0, %60 : vector<1x16x16x128xf32>
    %62 = arith.addf %56, %61 : vector<1x16x16x128xf32>
    %63 = vector.extract_strided_slice %1 {offsets = [2, 2, 0], sizes = [1, 1, 128], strides = [1, 1, 1]} : vector<3x3x128xf32> to vector<1x1x128xf32>
    %64 = vector.shape_cast %63 : vector<1x1x128xf32> to vector<128xf32>
    %65 = vector.shape_cast %64 : vector<128xf32> to vector<1x1x1x128xf32>
    %66 = vector.broadcast %65 : vector<1x1x1x128xf32> to vector<1x16x16x128xf32>
    %67 = arith.mulf %17, %66 : vector<1x16x16x128xf32>
    %68 = arith.addf %62, %67 : vector<1x16x16x128xf32>
    %cst_10 = arith.constant 0.000000e+00 : f32
    %69 = vector.broadcast %cst_10 : f32 to vector<1x1x16x128xf32>
    %70 = vector.extract_strided_slice %34 {offsets = [0, 0, 0, 0], sizes = [1, 15, 16, 128], strides = [1, 1, 1, 1]} : vector<1x16x16x128xf32> to vector<1x15x16x128xf32>
    %71 = tpu.concatenate %69, %70 in 1 : vector<1x1x16x128xf32>, vector<1x15x16x128xf32> -> vector<1x16x16x128xf32>
    %72 = vector.extract_strided_slice %68 {offsets = [0, 1, 0, 0], sizes = [1, 15, 16, 128], strides = [1, 1, 1, 1]} : vector<1x16x16x128xf32> to vector<1x15x16x128xf32>
    %73 = tpu.concatenate %72, %69 in 1 : vector<1x15x16x128xf32>, vector<1x1x16x128xf32> -> vector<1x16x16x128xf32>
    %74 = arith.addf %51, %71 : vector<1x16x16x128xf32>
    %75 = arith.addf %74, %73 : vector<1x16x16x128xf32>
    %76 = vector.shape_cast %2 : vector<1x128xf32> to vector<1x1x1x128xf32>
    %77 = vector.broadcast %76 : vector<1x1x1x128xf32> to vector<1x16x16x128xf32>
    %78 = arith.addf %75, %77 : vector<1x16x16x128xf32>
    %c0_11 = arith.constant 0 : index
    %c0_12 = arith.constant 0 : index
    %c0_13 = arith.constant 0 : index
    %c0_14 = arith.constant 0 : index
    %79 = vector.load %arg5[%c0_11, %c0_12, %c0_13, %c0_14] : memref<1x16x16x128xf32, #tpu.memory_space<vmem>>, vector<1x16x16x128xf32>
    tpu.vector_store %arg5[%c0_11, %c0_12, %c0_13, %c0_14], %78 {strides = array<i32>} : memref<1x16x16x128xf32, #tpu.memory_space<vmem>>, vector<1x16x16x128xf32>,
    return
  }
  func.func @transform_0(%arg0: i32, %arg1: i32) -> (i32, i32, i32, i32) {
    %c0_i32 = arith.constant 0 : i32
    %c0_i32_0 = arith.constant 0 : i32
    %c0_i32_1 = arith.constant 0 : i32
    return %arg0, %c0_i32, %c0_i32_0, %arg1 : i32, i32, i32, i32
  }
  func.func @transform_1(%arg0: i32, %arg1: i32) -> (i32, i32, i32) {
    %c0_i32 = arith.constant 0 : i32
    %c0_i32_0 = arith.constant 0 : i32
    %c0_i32_1 = arith.constant 0 : i32
    return %c0_i32, %c0_i32_0, %arg1 : i32, i32, i32
  }
  func.func @transform_2(%arg0: i32, %arg1: i32) -> (i32, i32) {
    %c0_i32 = arith.constant 0 : i32
    %c0_i32_0 = arith.constant 0 : i32
    return %c0_i32, %arg1 : i32, i32
  }
  func.func @transform_3(%arg0: i32, %arg1: i32) -> (i32, i32, i32, i32) {
    %c0_i32 = arith.constant 0 : i32
    %c0_i32_0 = arith.constant 0 : i32
    %c0_i32_1 = arith.constant 0 : i32
    return %arg0, %c0_i32, %c0_i32_0, %arg1 : i32, i32, i32, i32
  }
}

</mosaic_0001>

<llo_original>
// kernel: tpu_custom_call.1
$region0: #{tpu_custom_call.1}
  #allocation0 [shape = 'u32[]', space=smem, size = 0x4, offset = 0x4, fixed_abs, tag = 'smem constant byte address 0x4 - core index']
  #allocation1 [shape = 'u32[144,128]{1,0:T(1,128)}', space=vmem, size = 0x12000, scoped, tag = 'internal scratch']
  %s0 = inlined_call_operand.hbm [shape: f32[2,16,16,128], index: 0, kind: input, shape index: {}]
  %s1 = inlined_call_operand.hbm [shape: f32[3,3,128], index: 1, kind: input, shape index: {}]
  %s2 = inlined_call_operand.vmem [shape: f32[1,128], index: 2, kind: input, shape index: {}]
  %s3 = inlined_call_operand.hbm [shape: f32[2,16,16,128], index: 3, kind: output, shape index: {}]
  %s4 = sld [smem:[#allocation0]]
  $region53: #{tpu_custom_call.1} parent=0
    _
  %s6 = ssub.s32 1, %s4
  %s7 = scalar_select 0, %s6, %s4
  $region1: #{tpu_custom_call.1} parent=0
    #allocation2 [shape = 'u8[262144]{0}', space=vmem, size = 0x40000, scoped, tag = 'input window, operand 0']
    #allocation3 [shape = 's32[2]{0}', space=sflag, size = 0x8, scoped, tag = 'scoped memory for tpu_custom_call.1']
    #allocation4 [shape = 's32[2]{0}', space=sflag, size = 0x8, scoped, tag = 'scoped memory for tpu_custom_call.1']
    #allocation5 [shape = 'u8[6144]{0}', space=vmem, size = 0x1800, scoped, tag = 'input window, operand 1, single buffered']
    #allocation6 [shape = 's32[1]{0}', space=sflag, size = 0x4, scoped, tag = 'scoped memory for tpu_custom_call.1']
    #allocation7 [shape = 'u8[262144]{0}', space=vmem, size = 0x40000, scoped, tag = 'output window, operand 0']
    %8 = vsyncpa [#allocation3], 0
    %s9 = scalar_lea.sflag [#allocation3], 1
    %10 = vsyncpa %s9, 0
    %11 = vsyncpa [#allocation6], 0
    %12 = vsyncpa [#allocation4], 0
    %s13 = scalar_lea.sflag [#allocation4], 1
    %14 = vsyncpa %s13, 0
    loop: start=0, step=1, limit=4
    $region2: #{tpu_custom_call.1} parent=1 // loop_pre_header
      _
    $region3: #{tpu_custom_call.1} parent=1 // loop_header
      %s16 = sphi 0, %s20
      %p17 = scmp.ge.s32.totalorder %s16, 4
      %s23 = sphi 0, %s35
      %s24 = sphi 0, %s31
      %s25 = sphi 0, %s23
      %s26 = sphi 0, %s24
      %s27 = sphi 0, %s25
      %s28 = sphi 0, %s26
      %s40 = sphi 0, %s42
      %s43 = sphi 0, %s40
      %s44 = sphi 0, %s43
      %s60 = sphi 0, %s44
      %s66 = sphi 0, %s68
      %s69 = sphi 0, %s66
      %s70 = sphi 0, %s69
      %s86 = sphi 0, %s70
      %s92 = sphi 0, %s94
      %s95 = sphi 0, %s92
      %s96 = sphi 0, %s95
      %s112 = sphi 0, %s96
      %s120 = sphi 0, %s122
      %s123 = sphi 0, %s120
      %s124 = sphi 0, %s123
      %s140 = sphi 0, %s124
    $region4: #{tpu_custom_call.1} parent=1 // loop_header_branch
      %19 = sbr.rel (%p17) target = $region8
    $region5: #{tpu_custom_call.1} parent=1 // loop_body
      %s21 = ssub.s32 %s16, 1
      %s22 = ssub.s32 %s16, 2
      %s29 = sadd.s32 1, %s24
      %p30 = scmp.ge.s32.totalorder %s29, 1
      %s31 = scalar_select %p30, 0, %s29
      %s32 = sadd.s32 1, %s23
      %s33 = scalar_select %p30, %s32, %s23
      %p34 = scmp.ge.s32.totalorder %s33, 2
      %s35 = scalar_select %p34, 0, %s33
      %s36 = ssub.s32 %s23, %s35
      %s37 = ssub.s32 %s24, %s31
      %s38 = sor.u32 %s36, %s37
      %p39 = scmp.eq.s32.totalorder %s38, 0
      %s41 = sadd.s32 %s40, 1
      %s42 = scalar_select %p39, %s40, %s41
      %p45 = pneg %p39
      %p46 = scmp.eq.s32.totalorder %s16, 1
      %p47 = por %p45, %p46
      %p48 = scmp.ne.s32.totalorder %s40, %s43
      %p49 = scmp.eq.s32.totalorder %s16, 0
      %p50 = por %p48, %p49
      %p51 = scmp.ne.s32.totalorder %s40, %s43
      %p52 = scmp.eq.s32.totalorder %s21, 1
      %p53 = por %p51, %p52
      %p54 = scmp.ne.s32.totalorder %s43, %s44
      %p55 = scmp.eq.s32.totalorder %s21, 0
      %p56 = por %p54, %p55
      %p57 = scmp.ne.s32.totalorder %s43, %s44
      %p58 = scmp.eq.s32.totalorder %s22, 1
      %p59 = por %p57, %p58
      %p61 = scmp.ne.s32.totalorder %s44, %s60
      %p62 = scmp.eq.s32.totalorder %s22, 0
      %p63 = por %p61, %p62
      %s64 = ssub.s32 %s24, %s31
      %p65 = scmp.eq.s32.totalorder %s64, 0
      %s67 = sadd.s32 %s66, 1
      %s68 = scalar_select %p65, %s66, %s67
      %p71 = pneg %p65
      %p72 = scmp.eq.s32.totalorder %s16, 1
      %p73 = por %p71, %p72
      %p74 = scmp.ne.s32.totalorder %s66, %s69
      %p75 = scmp.eq.s32.totalorder %s16, 0
      %p76 = por %p74, %p75
      %p77 = scmp.ne.s32.totalorder %s66, %s69
      %p78 = scmp.eq.s32.totalorder %s21, 1
      %p79 = por %p77, %p78
      %p80 = scmp.ne.s32.totalorder %s69, %s70
      %p81 = scmp.eq.s32.totalorder %s21, 0
      %p82 = por %p80, %p81
      %p83 = scmp.ne.s32.totalorder %s69, %s70
      %p84 = scmp.eq.s32.totalorder %s22, 1
      %p85 = por %p83, %p84
      %p87 = scmp.ne.s32.totalorder %s70, %s86
      %p88 = scmp.eq.s32.totalorder %s22, 0
      %p89 = por %p87, %p88
      %s90 = ssub.s32 %s24, %s31
      %p91 = scmp.eq.s32.totalorder %s90, 0
      %s93 = sadd.s32 %s92, 1
      %s94 = scalar_select %p91, %s92, %s93
      %p97 = pneg %p91
      %p98 = scmp.eq.s32.totalorder %s16, 1
      %p99 = por %p97, %p98
      %p100 = scmp.ne.s32.totalorder %s92, %s95
      %p101 = scmp.eq.s32.totalorder %s16, 0
      %p102 = por %p100, %p101
      %p103 = scmp.ne.s32.totalorder %s92, %s95
      %p104 = scmp.eq.s32.totalorder %s21, 1
      %p105 = por %p103, %p104
      %p106 = scmp.ne.s32.totalorder %s95, %s96
      %p107 = scmp.eq.s32.totalorder %s21, 0
      %p108 = por %p106, %p107
      %p109 = scmp.ne.s32.totalorder %s95, %s96
      %p110 = scmp.eq.s32.totalorder %s22, 1
      %p111 = por %p109, %p110
      %p113 = scmp.ne.s32.totalorder %s96, %s112
      %p114 = scmp.eq.s32.totalorder %s22, 0
      %p115 = por %p113, %p114
      %s116 = ssub.s32 %s23, %s35
      %s117 = ssub.s32 %s24, %s31
      %s118 = sor.u32 %s116, %s117
      %p119 = scmp.eq.s32.totalorder %s118, 0
      %s121 = sadd.s32 %s120, 1
      %s122 = scalar_select %p119, %s120, %s121
      %p125 = pneg %p119
      %p126 = scmp.eq.s32.totalorder %s16, 1
      %p127 = por %p125, %p126
      %p128 = scmp.ne.s32.totalorder %s120, %s123
      %p129 = scmp.eq.s32.totalorder %s16, 0
      %p130 = por %p128, %p129
      %p131 = scmp.ne.s32.totalorder %s120, %s123
      %p132 = scmp.eq.s32.totalorder %s21, 1
      %p133 = por %p131, %p132
      %p134 = scmp.ne.s32.totalorder %s123, %s124
      %p135 = scmp.eq.s32.totalorder %s21, 0
      %p136 = por %p134, %p135
      %p137 = scmp.ne.s32.totalorder %s123, %s124
      %p138 = scmp.eq.s32.totalorder %s22, 1
      %p139 = por %p137, %p138
      %p141 = scmp.ne.s32.totalorder %s124, %s140
      %p142 = scmp.eq.s32.totalorder %s22, 0
      %p143 = por %p141, %p142
      %p144 = scmp.le.s32.totalorder 1, %s16
      %p145 = scmp.lt.s32.totalorder %s16, 3
      %p146 = pnand %p144, %p145
      %p147 = pneg %p146
      // Predicated region
      $region9: #{tpu_custom_call.1} parent=5 // pred_check
        _
      $region10: #{tpu_custom_call.1} parent=5 // pred_check_branch
        %149 = sbr.rel (%p146) target = $region12
      $region11: #{tpu_custom_call.1} parent=5 // pred_region
        %s150 = ssub.s32 %s16, 1
        // Predicated region
        $region13: #{tpu_custom_call.1} parent=11 // pred_check
          %p151 = pneg %p82
        $region14: #{tpu_custom_call.1} parent=11 // pred_check_branch
          %153 = sbr.rel (%p151) target = $region16
        $region15: #{tpu_custom_call.1} parent=11 // pred_region
          %s155 = ssub.s32 192, 192
          %156 = vsyncadd [#allocation6], %s155
          %s157 = smul.addr %s26, 64
          %s158 = scalar_lea.hbm %s1, %s157
          %s159 = sshll.u32 [#allocation5], 4
          %s160 = int_to_ptr.vmem [resolvable:$true] %s159
          %165 = dma.hbm_to_vmem [thread:$0]  %s158, 192, %s160, [#allocation6], 64, 64, 4
        $region16: #{tpu_custom_call.1} parent=11 // pred_fallthru
          _
        // Predicated region
        $region17: #{tpu_custom_call.1} parent=11 // pred_check
          %p166 = pneg %p108
        $region18: #{tpu_custom_call.1} parent=11 // pred_check_branch
          %168 = sbr.rel (%p166) target = $region20
        $region19: #{tpu_custom_call.1} parent=11 // pred_region
          %p169 = scmp.lt.s32.totalorder %s26, 0
          %s170 = scalar_select %p169, %s26, 0
          %s171 = scalar_lea.vmem %s2, %s170
        $region20: #{tpu_custom_call.1} parent=11 // pred_fallthru
          _
      $region12: #{tpu_custom_call.1} parent=5 // pred_fallthru
        _
      %p172 = scmp.lt.s32.totalorder %s16, 2
      // Predicated region
      $region21: #{tpu_custom_call.1} parent=5 // pred_check
        %p173 = pneg %p172
      $region22: #{tpu_custom_call.1} parent=5 // pred_check_branch
        %175 = sbr.rel (%p173) target = $region24
      $region23: #{tpu_custom_call.1} parent=5 // pred_region
        // Predicated region
        $region25: #{tpu_custom_call.1} parent=23 // pred_check
          %p176 = pneg %p50
        $region26: #{tpu_custom_call.1} parent=23 // pred_check_branch
          %178 = sbr.rel (%p176) target = $region28
        $region27: #{tpu_custom_call.1} parent=23 // pred_region
          %s179 = sand.u32 %s40, 1
          %s180 = scalar_lea.sflag [#allocation3], %s179
          %s181 = sand.u32 %s40, 1
          %s182 = smul.addr %s181, 256
          %s183 = scalar_lea.vmem [#allocation2], %s182
          %s185 = ssub.s32 4096, 4096
          %186 = vsyncadd %s180, %s185
          %s187 = smul.addr %s23, 32
          %s188 = sadd.s32 %s24, %s187
          %s189 = smul.addr %s188, 128
          %s190 = scalar_lea.hbm %s0, %s189
          %s191 = sshll.u32 %s183, 4
          %s192 = int_to_ptr.vmem [resolvable:$true] %s191
          %197 = dma.hbm_to_vmem [thread:$0]  %s190, 4096, %s192, %s180, 128, 128, 8
        $region28: #{tpu_custom_call.1} parent=23 // pred_fallthru
          _
      $region24: #{tpu_custom_call.1} parent=5 // pred_fallthru
        _
      %p198 = scmp.le.s32.totalorder 1, %s16
      %p199 = scmp.lt.s32.totalorder %s16, 3
      %p200 = pnand %p198, %p199
      %p201 = pneg %p200
      // Predicated region
      $region29: #{tpu_custom_call.1} parent=5 // pred_check
        _
      $region30: #{tpu_custom_call.1} parent=5 // pred_check_branch
        %203 = sbr.rel (%p200) target = $region32
      $region31: #{tpu_custom_call.1} parent=5 // pred_region
        %s204 = ssub.s32 %s16, 1
        %s205 = sand.u32 %s43, 1
        %s206 = scalar_lea.sflag [#allocation3], %s205
        %s207 = sand.u32 %s43, 1
        %s208 = smul.addr %s207, 256
        %s209 = scalar_lea.vmem [#allocation2], %s208
        // Predicated region
        $region33: #{tpu_custom_call.1} parent=31 // pred_check
          %p210 = pneg %p56
        $region34: #{tpu_custom_call.1} parent=31 // pred_check_branch
          %212 = sbr.rel (%p210) target = $region36
        $region35: #{tpu_custom_call.1} parent=31 // pred_region
          %213 = dma.done %s206, 4096
        $region36: #{tpu_custom_call.1} parent=31 // pred_fallthru
          _
        // Predicated region
        $region37: #{tpu_custom_call.1} parent=31 // pred_check
          %p214 = pneg %p82
        $region38: #{tpu_custom_call.1} parent=31 // pred_check_branch
          %216 = sbr.rel (%p214) target = $region40
        $region39: #{tpu_custom_call.1} parent=31 // pred_region
          %217 = dma.done [#allocation6], 192
        $region40: #{tpu_custom_call.1} parent=31 // pred_fallthru
          _
        %s218 = sand.u32 %s43, 1
        %s219 = scalar_lea.sflag [#allocation3], %s218
        %s220 = sand.u32 %s43, 1
        %s221 = smul.addr %s220, 256
        %s222 = scalar_lea.vmem [#allocation2], %s221
        %p223 = pneg %p56
        %p224 = pneg %p53
        %p225 = pneg %p82
        %p226 = pneg %p79
        %p227 = scmp.lt.s32.totalorder %s26, 0
        %s228 = scalar_select %p227, %s26, 0
        %s229 = scalar_lea.vmem %s2, %s228
        %p230 = pneg %p108
        %p231 = pneg %p105
        %p232 = pneg %p136
        %p233 = pneg %p133
        %s234 = sand.u32 %s123, 1
        %s235 = scalar_lea.sflag [#allocation4], %s234
        %s236 = sand.u32 %s123, 1
        %s237 = smul.addr %s236, 256
        %s238 = scalar_lea.vmem [#allocation7], %s237
        %p239 = scmp.lt.s32.totalorder %s26, 0
        %s240 = scalar_select %p239, %s26, 0
        %s241 = scalar_lea.vmem %s2, %s240
        %v242 = vld [vmem:[%s209] sm:$0xff]
        %v243 = vld [vmem:[%s209 + $0x8] sm:$0xff]
        %v244 = vld [vmem:[%s209 + $0x10] sm:$0xff]
        %v245 = vld [vmem:[%s209 + $0x18] sm:$0xff]
        %v246 = vld [vmem:[%s209 + $0x20] sm:$0xff]
        %v247 = vld [vmem:[%s209 + $0x28] sm:$0xff]
        %v248 = vld [vmem:[%s209 + $0x30] sm:$0xff]
        %v249 = vld [vmem:[%s209 + $0x38] sm:$0xff]
        %v250 = vld [vmem:[%s209 + $0x40] sm:$0xff]
        %v251 = vld [vmem:[%s209 + $0x48] sm:$0xff]
        %v252 = vld [vmem:[%s209 + $0x50] sm:$0xff]
        %v253 = vld [vmem:[%s209 + $0x58] sm:$0xff]
        %v254 = vld [vmem:[%s209 + $0x60] sm:$0xff]
        %v255 = vld [vmem:[%s209 + $0x68] sm:$0xff]
        %v256 = vld [vmem:[%s209 + $0x70] sm:$0xff]
        %v257 = vld [vmem:[%s209 + $0x78] sm:$0xff]
        %v258 = vld [vmem:[%s209 + $0x80] sm:$0xff]
        %v259 = vld [vmem:[%s209 + $0x88] sm:$0xff]
        %v260 = vld [vmem:[%s209 + $0x90] sm:$0xff]
        %v261 = vld [vmem:[%s209 + $0x98] sm:$0xff]
        %v262 = vld [vmem:[%s209 + $0xa0] sm:$0xff]
        %v263 = vld [vmem:[%s209 + $0xa8] sm:$0xff]
        %v264 = vld [vmem:[%s209 + $0xb0] sm:$0xff]
        %v265 = vld [vmem:[%s209 + $0xb8] sm:$0xff]
        %v266 = vld [vmem:[%s209 + $0xc0] sm:$0xff]
        %v267 = vld [vmem:[%s209 + $0xc8] sm:$0xff]
        %v268 = vld [vmem:[%s209 + $0xd0] sm:$0xff]
        %v269 = vld [vmem:[%s209 + $0xd8] sm:$0xff]
        %v270 = vld [vmem:[%s209 + $0xe0] sm:$0xff]
        %v271 = vld [vmem:[%s209 + $0xe8] sm:$0xff]
        %v272 = vld [vmem:[%s209 + $0xf0] sm:$0xff]
        %v273 = vld [vmem:[%s209 + $0xf8] sm:$0xff]
        %v274 = vld [vmem:[#allocation5] sm:$0x7]
        %v275 = vld [vmem:[#allocation5 + $0x4] sm:$0x7]
        %v276 = vld [vmem:[#allocation5 + $0x8] sm:$0x7]
        %v277 = vld [vmem:[%s241] sm:$0x1]
        %v278 = vlaneseq
        %v279 = vshrl.u32 %v278, 7
        %v280 = vadd.s32 %v279, 8
        %vm281 = vcmp.eq.s32.totalorder %v279, 0
        %vm282 = vcmp.eq.s32.totalorder %v280, 0
        %v283 = vrot.slane %v242, 7
        %v284 = vrot.slane %v244, 7
        %v285 = vrot.slane %v246, 7
        %v286 = vrot.slane %v248, 7
        %v287 = vrot.slane %v250, 7
        %v288 = vrot.slane %v252, 7
        %v289 = vrot.slane %v254, 7
        %v290 = vrot.slane %v256, 7
        %v291 = vrot.slane %v258, 7
        %v292 = vrot.slane %v260, 7
        %v293 = vrot.slane %v262, 7
        %v294 = vrot.slane %v264, 7
        %v295 = vrot.slane %v266, 7
        %v296 = vrot.slane %v268, 7
        %v297 = vrot.slane %v270, 7
        %v298 = vrot.slane %v272, 7
        %v299 = vrot.slane %v243, 7
        %v300 = vrot.slane %v245, 7
        %v301 = vrot.slane %v247, 7
        %v302 = vrot.slane %v249, 7
        %v303 = vrot.slane %v251, 7
        %v304 = vrot.slane %v253, 7
        %v305 = vrot.slane %v255, 7
        %v306 = vrot.slane %v257, 7
        %v307 = vrot.slane %v259, 7
        %v308 = vrot.slane %v261, 7
        %v309 = vrot.slane %v263, 7
        %v310 = vrot.slane %v265, 7
        %v311 = vrot.slane %v267, 7
        %v312 = vrot.slane %v269, 7
        %v313 = vrot.slane %v271, 7
        %v314 = vrot.slane %v273, 7
        %vm315 = vcmp.lt.s32.totalorder %v279, 1
        %v316 = vsel %vm315, %v283, %v299
        %v317 = vsel %vm315, %v284, %v300
        %v318 = vsel %vm315, %v285, %v301
        %v319 = vsel %vm315, %v286, %v302
        %v320 = vsel %vm315, %v287, %v303
        %v321 = vsel %vm315, %v288, %v304
        %v322 = vsel %vm315, %v289, %v305
        %v323 = vsel %vm315, %v290, %v306
        %v324 = vsel %vm315, %v291, %v307
        %v325 = vsel %vm315, %v292, %v308
        %v326 = vsel %vm315, %v293, %v309
        %v327 = vsel %vm315, %v294, %v310
        %v328 = vsel %vm315, %v295, %v311
        %v329 = vsel %vm315, %v296, %v312
        %v330 = vsel %vm315, %v297, %v313
        %v331 = vsel %vm315, %v298, %v314
        %v332 = vsel %vm315, %v299, %v283
        %v333 = vsel %vm315, %v300, %v284
        %v334 = vsel %vm315, %v301, %v285
        %v335 = vsel %vm315, %v302, %v286
        %v336 = vsel %vm315, %v303, %v287
        %v337 = vsel %vm315, %v304, %v288
        %v338 = vsel %vm315, %v305, %v289
        %v339 = vsel %vm315, %v306, %v290
        %v340 = vsel %vm315, %v307, %v291
        %v341 = vsel %vm315, %v308, %v292
        %v342 = vsel %vm315, %v309, %v293
        %v343 = vsel %vm315, %v310, %v294
        %v344 = vsel %vm315, %v311, %v295
        %v345 = vsel %vm315, %v312, %v296
        %v346 = vsel %vm315, %v313, %v297
        %v347 = vsel %vm315, %v314, %v298
        %v348 = vsel %vm281, 1, 0
        %v349 = vsel %vm282, 1, 0
        %vm350 = vcmp.eq.s32.totalorder %v348, 1
        %vm351 = vcmp.eq.s32.totalorder %v349, 1
        %v352 = vsel %vm350, 0.0, %v332
        %v353 = vsel %vm351, 0.0, %v316
        %v354 = vsel %vm350, 0.0, %v333
        %v355 = vsel %vm351, 0.0, %v317
        %v356 = vsel %vm350, 0.0, %v334
        %v357 = vsel %vm351, 0.0, %v318
        %v358 = vsel %vm350, 0.0, %v335
        %v359 = vsel %vm351, 0.0, %v319
        %v360 = vsel %vm350, 0.0, %v336
        %v361 = vsel %vm351, 0.0, %v320
        %v362 = vsel %vm350, 0.0, %v337
        %v363 = vsel %vm351, 0.0, %v321
        %v364 = vsel %vm350, 0.0, %v338
        %v365 = vsel %vm351, 0.0, %v322
        %v366 = vsel %vm350, 0.0, %v339
        %v367 = vsel %vm351, 0.0, %v323
        %v368 = vsel %vm350, 0.0, %v340
        %v369 = vsel %vm351, 0.0, %v324
        %v370 = vsel %vm350, 0.0, %v341
        %v371 = vsel %vm351, 0.0, %v325
        %v372 = vsel %vm350, 0.0, %v342
        %v373 = vsel %vm351, 0.0, %v326
        %v374 = vsel %vm350, 0.0, %v343
        %v375 = vsel %vm351, 0.0, %v327
        %v376 = vsel %vm350, 0.0, %v344
        %v377 = vsel %vm351, 0.0, %v328
        %v378 = vsel %vm350, 0.0, %v345
        %v379 = vsel %vm351, 0.0, %v329
        %v380 = vsel %vm350, 0.0, %v346
        %v381 = vsel %vm351, 0.0, %v330
        %v382 = vsel %vm350, 0.0, %v347
        %v383 = vsel %vm351, 0.0, %v331
        %vm384 = vcmp.eq.s32.totalorder %v279, 15
        %vm385 = vcmp.eq.s32.totalorder %v280, 15
        %v386 = vrot.slane %v242, 1
        %v387 = vrot.slane %v244, 1
        %v388 = vrot.slane %v246, 1
        %v389 = vrot.slane %v248, 1
        %v390 = vrot.slane %v250, 1
        %v391 = vrot.slane %v252, 1
        %v392 = vrot.slane %v254, 1
        %v393 = vrot.slane %v256, 1
        %v394 = vrot.slane %v258, 1
        %v395 = vrot.slane %v260, 1
        %v396 = vrot.slane %v262, 1
        %v397 = vrot.slane %v264, 1
        %v398 = vrot.slane %v266, 1
        %v399 = vrot.slane %v268, 1
        %v400 = vrot.slane %v270, 1
        %v401 = vrot.slane %v272, 1
        %v402 = vrot.slane %v243, 1
        %v403 = vrot.slane %v245, 1
        %v404 = vrot.slane %v247, 1
        %v405 = vrot.slane %v249, 1
        %v406 = vrot.slane %v251, 1
        %v407 = vrot.slane %v253, 1
        %v408 = vrot.slane %v255, 1
        %v409 = vrot.slane %v257, 1
        %v410 = vrot.slane %v259, 1
        %v411 = vrot.slane %v261, 1
        %v412 = vrot.slane %v263, 1
        %v413 = vrot.slane %v265, 1
        %v414 = vrot.slane %v267, 1
        %v415 = vrot.slane %v269, 1
        %v416 = vrot.slane %v271, 1
        %v417 = vrot.slane %v273, 1
        %vm418 = vcmp.lt.s32.totalorder %v279, 7
        %v419 = vsel %vm418, %v386, %v402
        %v420 = vsel %vm418, %v387, %v403
        %v421 = vsel %vm418, %v388, %v404
        %v422 = vsel %vm418, %v389, %v405
        %v423 = vsel %vm418, %v390, %v406
        %v424 = vsel %vm418, %v391, %v407
        %v425 = vsel %vm418, %v392, %v408
        %v426 = vsel %vm418, %v393, %v409
        %v427 = vsel %vm418, %v394, %v410
        %v428 = vsel %vm418, %v395, %v411
        %v429 = vsel %vm418, %v396, %v412
        %v430 = vsel %vm418, %v397, %v413
        %v431 = vsel %vm418, %v398, %v414
        %v432 = vsel %vm418, %v399, %v415
        %v433 = vsel %vm418, %v400, %v416
        %v434 = vsel %vm418, %v401, %v417
        %v435 = vsel %vm418, %v402, %v386
        %v436 = vsel %vm418, %v403, %v387
        %v437 = vsel %vm418, %v404, %v388
        %v438 = vsel %vm418, %v405, %v389
        %v439 = vsel %vm418, %v406, %v390
        %v440 = vsel %vm418, %v407, %v391
        %v441 = vsel %vm418, %v408, %v392
        %v442 = vsel %vm418, %v409, %v393
        %v443 = vsel %vm418, %v410, %v394
        %v444 = vsel %vm418, %v411, %v395
        %v445 = vsel %vm418, %v412, %v396
        %v446 = vsel %vm418, %v413, %v397
        %v447 = vsel %vm418, %v414, %v398
        %v448 = vsel %vm418, %v415, %v399
        %v449 = vsel %vm418, %v416, %v400
        %v450 = vsel %vm418, %v417, %v401
        %v451 = vsel %vm384, 1, 0
        %v452 = vsel %vm385, 1, 0
        %vm453 = vcmp.eq.s32.totalorder %v451, 1
        %vm454 = vcmp.eq.s32.totalorder %v452, 1
        %v455 = vsel %vm453, 0.0, %v419
        %v456 = vsel %vm454, 0.0, %v435
        %v457 = vsel %vm453, 0.0, %v420
        %v458 = vsel %vm454, 0.0, %v436
        %v459 = vsel %vm453, 0.0, %v421
        %v460 = vsel %vm454, 0.0, %v437
        %v461 = vsel %vm453, 0.0, %v422
        %v462 = vsel %vm454, 0.0, %v438
        %v463 = vsel %vm453, 0.0, %v423
        %v464 = vsel %vm454, 0.0, %v439
        %v465 = vsel %vm453, 0.0, %v424
        %v466 = vsel %vm454, 0.0, %v440
        %v467 = vsel %vm453, 0.0, %v425
        %v468 = vsel %vm454, 0.0, %v441
        %v469 = vsel %vm453, 0.0, %v426
        %v470 = vsel %vm454, 0.0, %v442
        %v471 = vsel %vm453, 0.0, %v427
        %v472 = vsel %vm454, 0.0, %v443
        %v473 = vsel %vm453, 0.0, %v428
        %v474 = vsel %vm454, 0.0, %v444
        %v475 = vsel %vm453, 0.0, %v429
        %v476 = vsel %vm454, 0.0, %v445
        %v477 = vsel %vm453, 0.0, %v430
        %v478 = vsel %vm454, 0.0, %v446
        %v479 = vsel %vm453, 0.0, %v431
        %v480 = vsel %vm454, 0.0, %v447
        %v481 = vsel %vm453, 0.0, %v432
        %v482 = vsel %vm454, 0.0, %v448
        %v483 = vsel %vm453, 0.0, %v433
        %v484 = vsel %vm454, 0.0, %v449
        %v485 = vsel %vm453, 0.0, %v434
        %v486 = vsel %vm454, 0.0, %v450
        %v487 = vlaneseq
        %v488 = vshrl.u32 %v487, 7
        %v489 = vsub.s32 0, %v488
        %v490 = vrot.slane %v274, %v489
        %v491 = vmul.f32 %v352, %v490
        %v492 = vmul.f32 %v353, %v490
        %v493 = vmul.f32 %v354, %v490
        %v494 = vmul.f32 %v355, %v490
        %v495 = vmul.f32 %v356, %v490
        %v496 = vmul.f32 %v357, %v490
        %v497 = vmul.f32 %v358, %v490
        %v498 = vmul.f32 %v359, %v490
        %v499 = vmul.f32 %v360, %v490
        %v500 = vmul.f32 %v361, %v490
        %v501 = vmul.f32 %v362, %v490
        %v502 = vmul.f32 %v363, %v490
        %v503 = vmul.f32 %v364, %v490
        %v504 = vmul.f32 %v365, %v490
        %v505 = vmul.f32 %v366, %v490
        %v506 = vmul.f32 %v367, %v490
        %v507 = vmul.f32 %v368, %v490
        %v508 = vmul.f32 %v369, %v490
        %v509 = vmul.f32 %v370, %v490
        %v510 = vmul.f32 %v371, %v490
        %v511 = vmul.f32 %v372, %v490
        %v512 = vmul.f32 %v373, %v490
        %v513 = vmul.f32 %v374, %v490
        %v514 = vmul.f32 %v375, %v490
        %v515 = vmul.f32 %v376, %v490
        %v516 = vmul.f32 %v377, %v490
        %v517 = vmul.f32 %v378, %v490
        %v518 = vmul.f32 %v379, %v490
        %v519 = vmul.f32 %v380, %v490
        %v520 = vmul.f32 %v381, %v490
        %v521 = vlaneseq
        %v522 = vshrl.u32 %v521, 7
        %v523 = vsub.s32 1, %v522
        %v524 = vrot.slane %v274, %v523
        %v525 = vmul.f32 %v242, %v524
        %v526 = vmul.f32 %v243, %v524
        %v527 = vmul.f32 %v244, %v524
        %v528 = vmul.f32 %v245, %v524
        %v529 = vmul.f32 %v246, %v524
        %v530 = vmul.f32 %v247, %v524
        %v531 = vmul.f32 %v248, %v524
        %v532 = vmul.f32 %v249, %v524
        %v533 = vmul.f32 %v250, %v524
        %v534 = vmul.f32 %v251, %v524
        %v535 = vmul.f32 %v252, %v524
        %v536 = vmul.f32 %v253, %v524
        %v537 = vmul.f32 %v254, %v524
        %v538 = vmul.f32 %v255, %v524
        %v539 = vmul.f32 %v256, %v524
        %v540 = vmul.f32 %v257, %v524
        %v541 = vmul.f32 %v258, %v524
        %v542 = vmul.f32 %v259, %v524
        %v543 = vmul.f32 %v260, %v524
        %v544 = vmul.f32 %v261, %v524
        %v545 = vmul.f32 %v262, %v524
        %v546 = vmul.f32 %v263, %v524
        %v547 = vmul.f32 %v264, %v524
        %v548 = vmul.f32 %v265, %v524
        %v549 = vmul.f32 %v266, %v524
        %v550 = vmul.f32 %v267, %v524
        %v551 = vmul.f32 %v268, %v524
        %v552 = vmul.f32 %v269, %v524
        %v553 = vmul.f32 %v270, %v524
        %v554 = vmul.f32 %v271, %v524
        %v555 = vadd.f32 %v491, %v525
        %v556 = vadd.f32 %v492, %v526
        %v557 = vadd.f32 %v493, %v527
        %v558 = vadd.f32 %v494, %v528
        %v559 = vadd.f32 %v495, %v529
        %v560 = vadd.f32 %v496, %v530
        %v561 = vadd.f32 %v497, %v531
        %v562 = vadd.f32 %v498, %v532
        %v563 = vadd.f32 %v499, %v533
        %v564 = vadd.f32 %v500, %v534
        %v565 = vadd.f32 %v501, %v535
        %v566 = vadd.f32 %v502, %v536
        %v567 = vadd.f32 %v503, %v537
        %v568 = vadd.f32 %v504, %v538
        %v569 = vadd.f32 %v505, %v539
        %v570 = vadd.f32 %v506, %v540
        %v571 = vadd.f32 %v507, %v541
        %v572 = vadd.f32 %v508, %v542
        %v573 = vadd.f32 %v509, %v543
        %v574 = vadd.f32 %v510, %v544
        %v575 = vadd.f32 %v511, %v545
        %v576 = vadd.f32 %v512, %v546
        %v577 = vadd.f32 %v513, %v547
        %v578 = vadd.f32 %v514, %v548
        %v579 = vadd.f32 %v515, %v549
        %v580 = vadd.f32 %v516, %v550
        %v581 = vadd.f32 %v517, %v551
        %v582 = vadd.f32 %v518, %v552
        %v583 = vadd.f32 %v519, %v553
        %v584 = vadd.f32 %v520, %v554
        %v585 = vlaneseq
        %v586 = vshrl.u32 %v585, 7
        %v587 = vsub.s32 2, %v586
        %v588 = vrot.slane %v274, %v587
        %v589 = vmul.f32 %v455, %v588
        %v590 = vmul.f32 %v456, %v588
        %v591 = vmul.f32 %v457, %v588
        %v592 = vmul.f32 %v458, %v588
        %v593 = vmul.f32 %v459, %v588
        %v594 = vmul.f32 %v460, %v588
        %v595 = vmul.f32 %v461, %v588
        %v596 = vmul.f32 %v462, %v588
        %v597 = vmul.f32 %v463, %v588
        %v598 = vmul.f32 %v464, %v588
        %v599 = vmul.f32 %v465, %v588
        %v600 = vmul.f32 %v466, %v588
        %v601 = vmul.f32 %v467, %v588
        %v602 = vmul.f32 %v468, %v588
        %v603 = vmul.f32 %v469, %v588
        %v604 = vmul.f32 %v470, %v588
        %v605 = vmul.f32 %v471, %v588
        %v606 = vmul.f32 %v472, %v588
        %v607 = vmul.f32 %v473, %v588
        %v608 = vmul.f32 %v474, %v588
        %v609 = vmul.f32 %v475, %v588
        %v610 = vmul.f32 %v476, %v588
        %v611 = vmul.f32 %v477, %v588
        %v612 = vmul.f32 %v478, %v588
        %v613 = vmul.f32 %v479, %v588
        %v614 = vmul.f32 %v480, %v588
        %v615 = vmul.f32 %v481, %v588
        %v616 = vmul.f32 %v482, %v588
        %v617 = vmul.f32 %v483, %v588
        %v618 = vmul.f32 %v484, %v588
        %v619 = vadd.f32 %v555, %v589
        %v620 = vadd.f32 %v556, %v590
        %v621 = vadd.f32 %v557, %v591
        %v622 = vadd.f32 %v558, %v592
        %v623 = vadd.f32 %v559, %v593
        %v624 = vadd.f32 %v560, %v594
        %v625 = vadd.f32 %v561, %v595
        %v626 = vadd.f32 %v562, %v596
        %v627 = vadd.f32 %v563, %v597
        %v628 = vadd.f32 %v564, %v598
        %v629 = vadd.f32 %v565, %v599
        %v630 = vadd.f32 %v566, %v600
        %v631 = vadd.f32 %v567, %v601
        %v632 = vadd.f32 %v568, %v602
        %v633 = vadd.f32 %v569, %v603
        %v634 = vadd.f32 %v570, %v604
        %v635 = vadd.f32 %v571, %v605
        %v636 = vadd.f32 %v572, %v606
        %v637 = vadd.f32 %v573, %v607
        %v638 = vadd.f32 %v574, %v608
        %v639 = vadd.f32 %v575, %v609
        %v640 = vadd.f32 %v576, %v610
        %v641 = vadd.f32 %v577, %v611
        %v642 = vadd.f32 %v578, %v612
        %v643 = vadd.f32 %v579, %v613
        %v644 = vadd.f32 %v580, %v614
        %v645 = vadd.f32 %v581, %v615
        %v646 = vadd.f32 %v582, %v616
        %v647 = vadd.f32 %v583, %v617
        %v648 = vadd.f32 %v584, %v618
        %v649 = vlaneseq
        %v650 = vshrl.u32 %v649, 7
        %v651 = vsub.s32 0, %v650
        %v652 = vrot.slane %v275, %v651
        %v653 = vmul.f32 %v352, %v652
        %v654 = vmul.f32 %v353, %v652
        %v655 = vmul.f32 %v354, %v652
        %v656 = vmul.f32 %v355, %v652
        %v657 = vmul.f32 %v356, %v652
        %v658 = vmul.f32 %v357, %v652
        %v659 = vmul.f32 %v358, %v652
        %v660 = vmul.f32 %v359, %v652
        %v661 = vmul.f32 %v360, %v652
        %v662 = vmul.f32 %v361, %v652
        %v663 = vmul.f32 %v362, %v652
        %v664 = vmul.f32 %v363, %v652
        %v665 = vmul.f32 %v364, %v652
        %v666 = vmul.f32 %v365, %v652
        %v667 = vmul.f32 %v366, %v652
        %v668 = vmul.f32 %v367, %v652
        %v669 = vmul.f32 %v368, %v652
        %v670 = vmul.f32 %v369, %v652
        %v671 = vmul.f32 %v370, %v652
        %v672 = vmul.f32 %v371, %v652
        %v673 = vmul.f32 %v372, %v652
        %v674 = vmul.f32 %v373, %v652
        %v675 = vmul.f32 %v374, %v652
        %v676 = vmul.f32 %v375, %v652
        %v677 = vmul.f32 %v376, %v652
        %v678 = vmul.f32 %v377, %v652
        %v679 = vmul.f32 %v378, %v652
        %v680 = vmul.f32 %v379, %v652
        %v681 = vmul.f32 %v380, %v652
        %v682 = vmul.f32 %v381, %v652
        %v683 = vmul.f32 %v382, %v652
        %v684 = vmul.f32 %v383, %v652
        %v685 = vlaneseq
        %v686 = vshrl.u32 %v685, 7
        %v687 = vsub.s32 1, %v686
        %v688 = vrot.slane %v275, %v687
        %v689 = vmul.f32 %v242, %v688
        %v690 = vmul.f32 %v243, %v688
        %v691 = vmul.f32 %v244, %v688
        %v692 = vmul.f32 %v245, %v688
        %v693 = vmul.f32 %v246, %v688
        %v694 = vmul.f32 %v247, %v688
        %v695 = vmul.f32 %v248, %v688
        %v696 = vmul.f32 %v249, %v688
        %v697 = vmul.f32 %v250, %v688
        %v698 = vmul.f32 %v251, %v688
        %v699 = vmul.f32 %v252, %v688
        %v700 = vmul.f32 %v253, %v688
        %v701 = vmul.f32 %v254, %v688
        %v702 = vmul.f32 %v255, %v688
        %v703 = vmul.f32 %v256, %v688
        %v704 = vmul.f32 %v257, %v688
        %v705 = vmul.f32 %v258, %v688
        %v706 = vmul.f32 %v259, %v688
        %v707 = vmul.f32 %v260, %v688
        %v708 = vmul.f32 %v261, %v688
        %v709 = vmul.f32 %v262, %v688
        %v710 = vmul.f32 %v263, %v688
        %v711 = vmul.f32 %v264, %v688
        %v712 = vmul.f32 %v265, %v688
        %v713 = vmul.f32 %v266, %v688
        %v714 = vmul.f32 %v267, %v688
        %v715 = vmul.f32 %v268, %v688
        %v716 = vmul.f32 %v269, %v688
        %v717 = vmul.f32 %v270, %v688
        %v718 = vmul.f32 %v271, %v688
        %v719 = vmul.f32 %v272, %v688
        %v720 = vmul.f32 %v273, %v688
        %v721 = vadd.f32 %v653, %v689
        %v722 = vadd.f32 %v654, %v690
        %v723 = vadd.f32 %v655, %v691
        %v724 = vadd.f32 %v656, %v692
        %v725 = vadd.f32 %v657, %v693
        %v726 = vadd.f32 %v658, %v694
        %v727 = vadd.f32 %v659, %v695
        %v728 = vadd.f32 %v660, %v696
        %v729 = vadd.f32 %v661, %v697
        %v730 = vadd.f32 %v662, %v698
        %v731 = vadd.f32 %v663, %v699
        %v732 = vadd.f32 %v664, %v700
        %v733 = vadd.f32 %v665, %v701
        %v734 = vadd.f32 %v666, %v702
        %v735 = vadd.f32 %v667, %v703
        %v736 = vadd.f32 %v668, %v704
        %v737 = vadd.f32 %v669, %v705
        %v738 = vadd.f32 %v670, %v706
        %v739 = vadd.f32 %v671, %v707
        %v740 = vadd.f32 %v672, %v708
        %v741 = vadd.f32 %v673, %v709
        %v742 = vadd.f32 %v674, %v710
        %v743 = vadd.f32 %v675, %v711
        %v744 = vadd.f32 %v676, %v712
        %v745 = vadd.f32 %v677, %v713
        %v746 = vadd.f32 %v678, %v714
        %v747 = vadd.f32 %v679, %v715
        %v748 = vadd.f32 %v680, %v716
        %v749 = vadd.f32 %v681, %v717
        %v750 = vadd.f32 %v682, %v718
        %v751 = vadd.f32 %v683, %v719
        %v752 = vadd.f32 %v684, %v720
        %v753 = vlaneseq
        %v754 = vshrl.u32 %v753, 7
        %v755 = vsub.s32 2, %v754
        %v756 = vrot.slane %v275, %v755
        %v757 = vmul.f32 %v455, %v756
        %v758 = vmul.f32 %v456, %v756
        %v759 = vmul.f32 %v457, %v756
        %v760 = vmul.f32 %v458, %v756
        %v761 = vmul.f32 %v459, %v756
        %v762 = vmul.f32 %v460, %v756
        %v763 = vmul.f32 %v461, %v756
        %v764 = vmul.f32 %v462, %v756
        %v765 = vmul.f32 %v463, %v756
        %v766 = vmul.f32 %v464, %v756
        %v767 = vmul.f32 %v465, %v756
        %v768 = vmul.f32 %v466, %v756
        %v769 = vmul.f32 %v467, %v756
        %v770 = vmul.f32 %v468, %v756
        %v771 = vmul.f32 %v469, %v756
        %v772 = vmul.f32 %v470, %v756
        %v773 = vmul.f32 %v471, %v756
        %v774 = vmul.f32 %v472, %v756
        %v775 = vmul.f32 %v473, %v756
        %v776 = vmul.f32 %v474, %v756
        %v777 = vmul.f32 %v475, %v756
        %v778 = vmul.f32 %v476, %v756
        %v779 = vmul.f32 %v477, %v756
        %v780 = vmul.f32 %v478, %v756
        %v781 = vmul.f32 %v479, %v756
        %v782 = vmul.f32 %v480, %v756
        %v783 = vmul.f32 %v481, %v756
        %v784 = vmul.f32 %v482, %v756
        %v785 = vmul.f32 %v483, %v756
        %v786 = vmul.f32 %v484, %v756
        %v787 = vmul.f32 %v485, %v756
        %v788 = vmul.f32 %v486, %v756
        %v789 = vadd.f32 %v721, %v757
        %v790 = vadd.f32 %v722, %v758
        %v791 = vadd.f32 %v723, %v759
        %v792 = vadd.f32 %v724, %v760
        %v793 = vadd.f32 %v725, %v761
        %v794 = vadd.f32 %v726, %v762
        %v795 = vadd.f32 %v727, %v763
        %v796 = vadd.f32 %v728, %v764
        %v797 = vadd.f32 %v729, %v765
        %v798 = vadd.f32 %v730, %v766
        %v799 = vadd.f32 %v731, %v767
        %v800 = vadd.f32 %v732, %v768
        %v801 = vadd.f32 %v733, %v769
        %v802 = vadd.f32 %v734, %v770
        %v803 = vadd.f32 %v735, %v771
        %v804 = vadd.f32 %v736, %v772
        %v805 = vadd.f32 %v737, %v773
        %v806 = vadd.f32 %v738, %v774
        %v807 = vadd.f32 %v739, %v775
        %v808 = vadd.f32 %v740, %v776
        %v809 = vadd.f32 %v741, %v777
        %v810 = vadd.f32 %v742, %v778
        %v811 = vadd.f32 %v743, %v779
        %v812 = vadd.f32 %v744, %v780
        %v813 = vadd.f32 %v745, %v781
        %v814 = vadd.f32 %v746, %v782
        %v815 = vadd.f32 %v747, %v783
        %v816 = vadd.f32 %v748, %v784
        %v817 = vadd.f32 %v749, %v785
        %v818 = vadd.f32 %v750, %v786
        %v819 = vadd.f32 %v751, %v787
        %v820 = vadd.f32 %v752, %v788
        %v821 = vlaneseq
        %v822 = vshrl.u32 %v821, 7
        %v823 = vsub.s32 0, %v822
        %v824 = vrot.slane %v276, %v823
        %v825 = vmul.f32 %v354, %v824
        %v826 = vmul.f32 %v355, %v824
        %v827 = vmul.f32 %v356, %v824
        %v828 = vmul.f32 %v357, %v824
        %v829 = vmul.f32 %v358, %v824
        %v830 = vmul.f32 %v359, %v824
        %v831 = vmul.f32 %v360, %v824
        %v832 = vmul.f32 %v361, %v824
        %v833 = vmul.f32 %v362, %v824
        %v834 = vmul.f32 %v363, %v824
        %v835 = vmul.f32 %v364, %v824
        %v836 = vmul.f32 %v365, %v824
        %v837 = vmul.f32 %v366, %v824
        %v838 = vmul.f32 %v367, %v824
        %v839 = vmul.f32 %v368, %v824
        %v840 = vmul.f32 %v369, %v824
        %v841 = vmul.f32 %v370, %v824
        %v842 = vmul.f32 %v371, %v824
        %v843 = vmul.f32 %v372, %v824
        %v844 = vmul.f32 %v373, %v824
        %v845 = vmul.f32 %v374, %v824
        %v846 = vmul.f32 %v375, %v824
        %v847 = vmul.f32 %v376, %v824
        %v848 = vmul.f32 %v377, %v824
        %v849 = vmul.f32 %v378, %v824
        %v850 = vmul.f32 %v379, %v824
        %v851 = vmul.f32 %v380, %v824
        %v852 = vmul.f32 %v381, %v824
        %v853 = vmul.f32 %v382, %v824
        %v854 = vmul.f32 %v383, %v824
        %v855 = vlaneseq
        %v856 = vshrl.u32 %v855, 7
        %v857 = vsub.s32 1, %v856
        %v858 = vrot.slane %v276, %v857
        %v859 = vmul.f32 %v244, %v858
        %v860 = vmul.f32 %v245, %v858
        %v861 = vmul.f32 %v246, %v858
        %v862 = vmul.f32 %v247, %v858
        %v863 = vmul.f32 %v248, %v858
        %v864 = vmul.f32 %v249, %v858
        %v865 = vmul.f32 %v250, %v858
        %v866 = vmul.f32 %v251, %v858
        %v867 = vmul.f32 %v252, %v858
        %v868 = vmul.f32 %v253, %v858
        %v869 = vmul.f32 %v254, %v858
        %v870 = vmul.f32 %v255, %v858
        %v871 = vmul.f32 %v256, %v858
        %v872 = vmul.f32 %v257, %v858
        %v873 = vmul.f32 %v258, %v858
        %v874 = vmul.f32 %v259, %v858
        %v875 = vmul.f32 %v260, %v858
        %v876 = vmul.f32 %v261, %v858
        %v877 = vmul.f32 %v262, %v858
        %v878 = vmul.f32 %v263, %v858
        %v879 = vmul.f32 %v264, %v858
        %v880 = vmul.f32 %v265, %v858
        %v881 = vmul.f32 %v266, %v858
        %v882 = vmul.f32 %v267, %v858
        %v883 = vmul.f32 %v268, %v858
        %v884 = vmul.f32 %v269, %v858
        %v885 = vmul.f32 %v270, %v858
        %v886 = vmul.f32 %v271, %v858
        %v887 = vmul.f32 %v272, %v858
        %v888 = vmul.f32 %v273, %v858
        %v889 = vadd.f32 %v825, %v859
        %v890 = vadd.f32 %v826, %v860
        %v891 = vadd.f32 %v827, %v861
        %v892 = vadd.f32 %v828, %v862
        %v893 = vadd.f32 %v829, %v863
        %v894 = vadd.f32 %v830, %v864
        %v895 = vadd.f32 %v831, %v865
        %v896 = vadd.f32 %v832, %v866
        %v897 = vadd.f32 %v833, %v867
        %v898 = vadd.f32 %v834, %v868
        %v899 = vadd.f32 %v835, %v869
        %v900 = vadd.f32 %v836, %v870
        %v901 = vadd.f32 %v837, %v871
        %v902 = vadd.f32 %v838, %v872
        %v903 = vadd.f32 %v839, %v873
        %v904 = vadd.f32 %v840, %v874
        %v905 = vadd.f32 %v841, %v875
        %v906 = vadd.f32 %v842, %v876
        %v907 = vadd.f32 %v843, %v877
        %v908 = vadd.f32 %v844, %v878
        %v909 = vadd.f32 %v845, %v879
        %v910 = vadd.f32 %v846, %v880
        %v911 = vadd.f32 %v847, %v881
        %v912 = vadd.f32 %v848, %v882
        %v913 = vadd.f32 %v849, %v883
        %v914 = vadd.f32 %v850, %v884
        %v915 = vadd.f32 %v851, %v885
        %v916 = vadd.f32 %v852, %v886
        %v917 = vadd.f32 %v853, %v887
        %v918 = vadd.f32 %v854, %v888
        %v919 = vlaneseq
        %v920 = vshrl.u32 %v919, 7
        %v921 = vsub.s32 2, %v920
        %v922 = vrot.slane %v276, %v921
        %v923 = vmul.f32 %v457, %v922
        %v924 = vmul.f32 %v458, %v922
        %v925 = vmul.f32 %v459, %v922
        %v926 = vmul.f32 %v460, %v922
        %v927 = vmul.f32 %v461, %v922
        %v928 = vmul.f32 %v462, %v922
        %v929 = vmul.f32 %v463, %v922
        %v930 = vmul.f32 %v464, %v922
        %v931 = vmul.f32 %v465, %v922
        %v932 = vmul.f32 %v466, %v922
        %v933 = vmul.f32 %v467, %v922
        %v934 = vmul.f32 %v468, %v922
        %v935 = vmul.f32 %v469, %v922
        %v936 = vmul.f32 %v470, %v922
        %v937 = vmul.f32 %v471, %v922
        %v938 = vmul.f32 %v472, %v922
        %v939 = vmul.f32 %v473, %v922
        %v940 = vmul.f32 %v474, %v922
        %v941 = vmul.f32 %v475, %v922
        %v942 = vmul.f32 %v476, %v922
        %v943 = vmul.f32 %v477, %v922
        %v944 = vmul.f32 %v478, %v922
        %v945 = vmul.f32 %v479, %v922
        %v946 = vmul.f32 %v480, %v922
        %v947 = vmul.f32 %v481, %v922
        %v948 = vmul.f32 %v482, %v922
        %v949 = vmul.f32 %v483, %v922
        %v950 = vmul.f32 %v484, %v922
        %v951 = vmul.f32 %v485, %v922
        %v952 = vmul.f32 %v486, %v922
        %v953 = vadd.f32 %v889, %v923
        %v954 = vadd.f32 %v890, %v924
        %v955 = vadd.f32 %v891, %v925
        %v956 = vadd.f32 %v892, %v926
        %v957 = vadd.f32 %v893, %v927
        %v958 = vadd.f32 %v894, %v928
        %v959 = vadd.f32 %v895, %v929
        %v960 = vadd.f32 %v896, %v930
        %v961 = vadd.f32 %v897, %v931
        %v962 = vadd.f32 %v898, %v932
        %v963 = vadd.f32 %v899, %v933
        %v964 = vadd.f32 %v900, %v934
        %v965 = vadd.f32 %v901, %v935
        %v966 = vadd.f32 %v902, %v936
        %v967 = vadd.f32 %v903, %v937
        %v968 = vadd.f32 %v904, %v938
        %v969 = vadd.f32 %v905, %v939
        %v970 = vadd.f32 %v906, %v940
        %v971 = vadd.f32 %v907, %v941
        %v972 = vadd.f32 %v908, %v942
        %v973 = vadd.f32 %v909, %v943
        %v974 = vadd.f32 %v910, %v944
        %v975 = vadd.f32 %v911, %v945
        %v976 = vadd.f32 %v912, %v946
        %v977 = vadd.f32 %v913, %v947
        %v978 = vadd.f32 %v914, %v948
        %v979 = vadd.f32 %v915, %v949
        %v980 = vadd.f32 %v916, %v950
        %v981 = vadd.f32 %v917, %v951
        %v982 = vadd.f32 %v918, %v952
        %v983 = vadd.f32 %v789, 0.0
        %v984 = vadd.f32 %v790, 0.0
        %v985 = vadd.f32 %v791, %v619
        %v986 = vadd.f32 %v792, %v620
        %v987 = vadd.f32 %v793, %v621
        %v988 = vadd.f32 %v794, %v622
        %v989 = vadd.f32 %v795, %v623
        %v990 = vadd.f32 %v796, %v624
        %v991 = vadd.f32 %v797, %v625
        %v992 = vadd.f32 %v798, %v626
        %v993 = vadd.f32 %v799, %v627
        %v994 = vadd.f32 %v800, %v628
        %v995 = vadd.f32 %v801, %v629
        %v996 = vadd.f32 %v802, %v630
        %v997 = vadd.f32 %v803, %v631
        %v998 = vadd.f32 %v804, %v632
        %v999 = vadd.f32 %v805, %v633
        %v1000 = vadd.f32 %v806, %v634
        %v1001 = vadd.f32 %v807, %v635
        %v1002 = vadd.f32 %v808, %v636
        %v1003 = vadd.f32 %v809, %v637
        %v1004 = vadd.f32 %v810, %v638
        %v1005 = vadd.f32 %v811, %v639
        %v1006 = vadd.f32 %v812, %v640
        %v1007 = vadd.f32 %v813, %v641
        %v1008 = vadd.f32 %v814, %v642
        %v1009 = vadd.f32 %v815, %v643
        %v1010 = vadd.f32 %v816, %v644
        %v1011 = vadd.f32 %v817, %v645
        %v1012 = vadd.f32 %v818, %v646
        %v1013 = vadd.f32 %v819, %v647
        %v1014 = vadd.f32 %v820, %v648
        %v1015 = vadd.f32 %v983, %v953
        %v1016 = vadd.f32 %v984, %v954
        %v1017 = vadd.f32 %v985, %v955
        %v1018 = vadd.f32 %v986, %v956
        %v1019 = vadd.f32 %v987, %v957
        %v1020 = vadd.f32 %v988, %v958
        %v1021 = vadd.f32 %v989, %v959
        %v1022 = vadd.f32 %v990, %v960
        %v1023 = vadd.f32 %v991, %v961
        %v1024 = vadd.f32 %v992, %v962
        %v1025 = vadd.f32 %v993, %v963
        %v1026 = vadd.f32 %v994, %v964
        %v1027 = vadd.f32 %v995, %v965
        %v1028 = vadd.f32 %v996, %v966
        %v1029 = vadd.f32 %v997, %v967
        %v1030 = vadd.f32 %v998, %v968
        %v1031 = vadd.f32 %v999, %v969
        %v1032 = vadd.f32 %v1000, %v970
        %v1033 = vadd.f32 %v1001, %v971
        %v1034 = vadd.f32 %v1002, %v972
        %v1035 = vadd.f32 %v1003, %v973
        %v1036 = vadd.f32 %v1004, %v974
        %v1037 = vadd.f32 %v1005, %v975
        %v1038 = vadd.f32 %v1006, %v976
        %v1039 = vadd.f32 %v1007, %v977
        %v1040 = vadd.f32 %v1008, %v978
        %v1041 = vadd.f32 %v1009, %v979
        %v1042 = vadd.f32 %v1010, %v980
        %v1043 = vadd.f32 %v1011, %v981
        %v1044 = vadd.f32 %v1012, %v982
        %v1045 = vadd.f32 %v1013, 0.0
        %v1046 = vadd.f32 %v1014, 0.0
        %v1048 = vlaneseq
        %v1049 = vshrl.u32 %v1048, 7
        %v1050 = vsub.s32 0, %v1049
        %v1051 = vrot.slane %v277, %v1050
        %v1053 = vadd.f32 %v1015, %v1051
        %v1054 = vadd.f32 %v1016, %v1051
        %v1055 = vadd.f32 %v1017, %v1051
        %v1056 = vadd.f32 %v1018, %v1051
        %v1057 = vadd.f32 %v1019, %v1051
        %v1058 = vadd.f32 %v1020, %v1051
        %v1059 = vadd.f32 %v1021, %v1051
        %v1060 = vadd.f32 %v1022, %v1051
        %v1061 = vadd.f32 %v1023, %v1051
        %v1062 = vadd.f32 %v1024, %v1051
        %v1063 = vadd.f32 %v1025, %v1051
        %v1064 = vadd.f32 %v1026, %v1051
        %v1065 = vadd.f32 %v1027, %v1051
        %v1066 = vadd.f32 %v1028, %v1051
        %v1067 = vadd.f32 %v1029, %v1051
        %v1068 = vadd.f32 %v1030, %v1051
        %v1069 = vadd.f32 %v1031, %v1051
        %v1070 = vadd.f32 %v1032, %v1051
        %v1071 = vadd.f32 %v1033, %v1051
        %v1072 = vadd.f32 %v1034, %v1051
        %v1073 = vadd.f32 %v1035, %v1051
        %v1074 = vadd.f32 %v1036, %v1051
        %v1075 = vadd.f32 %v1037, %v1051
        %v1076 = vadd.f32 %v1038, %v1051
        %v1077 = vadd.f32 %v1039, %v1051
        %v1078 = vadd.f32 %v1040, %v1051
        %v1079 = vadd.f32 %v1041, %v1051
        %v1080 = vadd.f32 %v1042, %v1051
        %v1081 = vadd.f32 %v1043, %v1051
        %v1082 = vadd.f32 %v1044, %v1051
        %v1083 = vadd.f32 %v1045, %v1051
        %v1084 = vadd.f32 %v1046, %v1051
        %1085 = vst [vmem:[%s238] sm:$0xff] %v1053
        %1086 = vst [vmem:[%s238 + $0x8] sm:$0xff] %v1054
        %1087 = vst [vmem:[%s238 + $0x10] sm:$0xff] %v1055
        %1088 = vst [vmem:[%s238 + $0x18] sm:$0xff] %v1056
        %1089 = vst [vmem:[%s238 + $0x20] sm:$0xff] %v1057
        %1090 = vst [vmem:[%s238 + $0x28] sm:$0xff] %v1058
        %1091 = vst [vmem:[%s238 + $0x30] sm:$0xff] %v1059
        %1092 = vst [vmem:[%s238 + $0x38] sm:$0xff] %v1060
        %1093 = vst [vmem:[%s238 + $0x40] sm:$0xff] %v1061
        %1094 = vst [vmem:[%s238 + $0x48] sm:$0xff] %v1062
        %1095 = vst [vmem:[%s238 + $0x50] sm:$0xff] %v1063
        %1096 = vst [vmem:[%s238 + $0x58] sm:$0xff] %v1064
        %1097 = vst [vmem:[%s238 + $0x60] sm:$0xff] %v1065
        %1098 = vst [vmem:[%s238 + $0x68] sm:$0xff] %v1066
        %1099 = vst [vmem:[%s238 + $0x70] sm:$0xff] %v1067
        %1100 = vst [vmem:[%s238 + $0x78] sm:$0xff] %v1068
        %1101 = vst [vmem:[%s238 + $0x80] sm:$0xff] %v1069
        %1102 = vst [vmem:[%s238 + $0x88] sm:$0xff] %v1070
        %1103 = vst [vmem:[%s238 + $0x90] sm:$0xff] %v1071
        %1104 = vst [vmem:[%s238 + $0x98] sm:$0xff] %v1072
        %1105 = vst [vmem:[%s238 + $0xa0] sm:$0xff] %v1073
        %1106 = vst [vmem:[%s238 + $0xa8] sm:$0xff] %v1074
        %1107 = vst [vmem:[%s238 + $0xb0] sm:$0xff] %v1075
        %1108 = vst [vmem:[%s238 + $0xb8] sm:$0xff] %v1076
        %1109 = vst [vmem:[%s238 + $0xc0] sm:$0xff] %v1077
        %1110 = vst [vmem:[%s238 + $0xc8] sm:$0xff] %v1078
        %1111 = vst [vmem:[%s238 + $0xd0] sm:$0xff] %v1079
        %1112 = vst [vmem:[%s238 + $0xd8] sm:$0xff] %v1080
        %1113 = vst [vmem:[%s238 + $0xe0] sm:$0xff] %v1081
        %1114 = vst [vmem:[%s238 + $0xe8] sm:$0xff] %v1082
        %1115 = vst [vmem:[%s238 + $0xf0] sm:$0xff] %v1083
        %1116 = vst [vmem:[%s238 + $0xf8] sm:$0xff] %v1084
        %s1117 = sand.u32 %s123, 1
        %s1118 = scalar_lea.sflag [#allocation4], %s1117
        %s1119 = sand.u32 %s123, 1
        %s1120 = smul.addr %s1119, 256
        %s1121 = scalar_lea.vmem [#allocation7], %s1120
        // Predicated region
        $region41: #{tpu_custom_call.1} parent=31 // pred_check
          %p1122 = pneg %p133
        $region42: #{tpu_custom_call.1} parent=31 // pred_check_branch
          %1124 = sbr.rel (%p1122) target = $region44
        $region43: #{tpu_custom_call.1} parent=31 // pred_region
          %s1126 = ssub.s32 4096, 4096
          %1127 = vsyncadd %s1118, %s1126
          %s1128 = smul.addr %s25, 32
          %s1129 = sadd.s32 %s26, %s1128
          %s1130 = smul.addr %s1129, 128
          %s1131 = scalar_lea.hbm %s3, %s1130
          %s1132 = sshll.u32 %s1121, 4
          %s1133 = int_to_ptr.vmem [resolvable:$true] %s1132
          %1138 = dma.vmem_to_hbm [thread:$0]  %s1133, 4096, %s1131, %s1118, 128, 128, 8
        $region44: #{tpu_custom_call.1} parent=31 // pred_fallthru
          _
      $region32: #{tpu_custom_call.1} parent=5 // pred_fallthru
        _
      %p1139 = scmp.le.s32.totalorder 2, %s16
      // Predicated region
      $region45: #{tpu_custom_call.1} parent=5 // pred_check
        %p1140 = pneg %p1139
      $region46: #{tpu_custom_call.1} parent=5 // pred_check_branch
        %1142 = sbr.rel (%p1140) target = $region48
      $region47: #{tpu_custom_call.1} parent=5 // pred_region
        %s1143 = ssub.s32 %s16, 2
        // Predicated region
        $region49: #{tpu_custom_call.1} parent=47 // pred_check
          %p1144 = pneg %p139
        $region50: #{tpu_custom_call.1} parent=47 // pred_check_branch
          %1146 = sbr.rel (%p1144) target = $region52
        $region51: #{tpu_custom_call.1} parent=47 // pred_region
          %s1147 = sand.u32 %s124, 1
          %s1148 = scalar_lea.sflag [#allocation4], %s1147
          %s1149 = sand.u32 %s124, 1
          %s1150 = smul.addr %s1149, 256
          %s1151 = scalar_lea.vmem [#allocation7], %s1150
          %1152 = dma.done %s1148, 4096
        $region52: #{tpu_custom_call.1} parent=47 // pred_fallthru
          _
      $region48: #{tpu_custom_call.1} parent=5 // pred_fallthru
        _
    $region6: #{tpu_custom_call.1} parent=1 // loop_footer
      %s20 = sadd.s32 1, %s16
    $region7: #{tpu_custom_call.1} parent=1 // loop_footer_branch
      %15 = sbr.rel target = $region3
    $region8: #{tpu_custom_call.1} parent=1 // loop_exit
      _
    %1153 = vsyncpa [#allocation3], 1
    %s1154 = scalar_lea.sflag [#allocation3], 1
    %1155 = vsyncpa %s1154, 1
    %1156 = vsyncpa [#allocation6], 1
    %1157 = vsyncpa [#allocation4], 1
    %s1158 = scalar_lea.sflag [#allocation4], 1
    %1159 = vsyncpa %s1158, 1

</llo_original>
